<compile_context>
chip_gen: v7x
topology: tpu7x:2x2x1
jax: 0.10.0
libtpu: 0.0.40
codegen_flags: <defaults>
</compile_context>

<pallas_src>
import math

import jax
import jax.numpy as jnp
from jax import lax
from jax.experimental import pallas as pl
from jax.experimental.pallas import tpu as pltpu


# 2 * sqrt(2/pi): 0.5*(1+tanh(z)) == sigmoid(2z), fold the 2 into the constant.
_TWO_SQRT_2_OVER_PI = 2.0 * math.sqrt(2.0 / math.pi)
_HIDDEN_CHUNK = 512  # slab width for the chunked (large-Di) kernel


def _gelu_tanh(x):
    # Exactly PyTorch nn.GELU(approximate='tanh'), written in sigmoid form:
    #   0.5*x*(1+tanh(sqrt(2/pi)*(x+0.044715*x^3)))
    # = x * sigmoid(2*sqrt(2/pi)*(x+0.044715*x^3))
    return x * jax.nn.sigmoid(_TWO_SQRT_2_OVER_PI * (x + 0.044715 * (x * x * x)))


# ------------------------- kernels ------------------------------------------


def _mlp_kernel(x_ref, w1_ref, b1_ref, w2_ref, b2_ref, o_ref):
    # x_ref: (tm, Dp)   w1_ref: (Dp, Dip)  b1_ref: (1, Dip)
    # w2_ref: (Dip, Dp) b2_ref: (1, Dp)    o_ref: (tm, Dp)
    # MXU consumes operands in their stored dtype (bf16 by default), f32 accumulate.
    h = jnp.dot(x_ref[...], w1_ref[...], preferred_element_type=jnp.float32)
    h = h + b1_ref[...].astype(jnp.float32)
    h = _gelu_tanh(h)                       # f32 on VPU + EUP logistic
    h = h.astype(w2_ref.dtype)              # back to weight dtype for 2nd MXU pass
    y = jnp.dot(h, w2_ref[...], preferred_element_type=jnp.float32)
    y = y + b2_ref[...].astype(jnp.float32)
    o_ref[...] = y.astype(o_ref.dtype)


def _make_chunked_kernel(n_chunks, chunk):
    # Large-Di variant: never materialize the full (tm, Dip) f32 hidden
    # intermediate; accumulate per-slab contributions into an f32 VMEM scratch.
    def kernel(x_ref, w1_ref, b1_ref, w2_ref, b2_ref, o_ref, acc_ref):
        acc_ref[...] = jnp.zeros_like(acc_ref)

        def body(k, carry):
            k0 = pl.multiple_of(k * chunk, chunk)
            h = jnp.dot(x_ref[...], w1_ref[:, pl.ds(k0, chunk)],
                        preferred_element_type=jnp.float32)
            h = h + b1_ref[:, pl.ds(k0, chunk)].astype(jnp.float32)
            h = _gelu_tanh(h).astype(w2_ref.dtype)
            acc_ref[...] += jnp.dot(h, w2_ref[pl.ds(k0, chunk), :],
                                    preferred_element_type=jnp.float32)
            return carry

        lax.fori_loop(0, n_chunks, body, 0)
        y = acc_ref[...] + b2_ref[...].astype(jnp.float32)
        o_ref[...] = y.astype(o_ref.dtype)

    return kernel


# ------------------------- wrapper helpers -----------------------------------


def _round_up(n, m):
    return ((n + m - 1) // m) * m


def _pad_axis(a, axis, new_size):
    pad = new_size - a.shape[axis]
    if pad == 0:
        return a
    cfg = [(0, 0)] * a.ndim
    cfg[axis] = (0, pad)
    return jnp.pad(a, cfg)


def _vmem_budget_bytes():
    """Per-core VMEM budget with headroom for Mosaic internal scratch."""
    cap = None
    try:
        info = pltpu.get_tpu_info()
        cap = getattr(info, "vmem_capacity_bytes", None)
    except Exception:
        cap = None
    if not cap or cap <= 0:
        cap = 64 * 2**20  # conservative default (v7x per-TC)
    return int(cap - max(8 * 2**20, cap // 8))  # 128MiB -> ~112MiB, 64MiB -> 56MiB


def _resident_spec(shape):
    """Grid-invariant operand: constant index_map, single-buffered (no re-DMA)."""
    ndim = len(shape)
    idx = lambda *args: (0,) * ndim
    if hasattr(pl, "Buffered"):
        try:
            return pl.BlockSpec(shape, idx, pipeline_mode=pl.Buffered(1))
        except TypeError:
            pass  # older BlockSpec signature: fall back to default buffering
    return pl.BlockSpec(shape, idx)


def _pick_tile_m(M, Dp, Dip, xb, ob, budget, resident_bytes, chunked):
    if M <= 512:
        return M  # single block; full-extent block satisfies the (8,128) rule
    hid_bytes = Dp * 4 if chunked else Dip * 4       # f32 acc vs full f32 hidden
    per_row = 2 * Dp * xb + 2 * Dp * ob + hid_bytes  # dbuf x + dbuf out + interm.
    avail = max(budget - resident_bytes, 8 * 2**20)
    cap_rows = max(256, min(1024, (avail // per_row) // 256 * 256))
    for cand in (1024, 512, 256):
        # >=4 grid steps: pipelining + megacore sharding on v7x.
        if cand <= cap_rows and M >= 4 * cand:
            return cand
    return 256


# ------------------------- public entry point ---------------------------------


def mlp_pallas(x, w1, b1, w2, b2, *, tile_m=None, compute_dtype=jnp.bfloat16):
    """x: [B,S,D]; w1: [D,Di]; b1: [Di]; w2: [Di,D]; b2: [D] -> [B,S,D].

    Weights are stored pre-transposed (y = x @ W + b), matching nn.Linear's
    y = x @ W.T + b semantics. Call under jax.jit so padding/slicing fuse.
    """
    B, S, D = x.shape
    Di = w1.shape[1]
    M = B * S
    out_dtype = x.dtype

    if compute_dtype is not None and compute_dtype != x.dtype:
        # bf16 MXU operands (native on v5e/v6e/v7x), f32 accumulation in-kernel.
        x, w1, b1, w2, b2 = (t.astype(compute_dtype) for t in (x, w1, b1, w2, b2))

    x2 = x.reshape(M, D)

    # Lane-dense padding: feature dims -> multiples of 128 (zero padding is exact;
    # padded hidden columns are GELU(0)*0-weights and contribute nothing).
    # Note: real model shapes should prefer multiples of 256 on v6e/v7x MXUs.
    Dp, Dip = _round_up(D, 128), _round_up(Di, 128)
    x2 = _pad_axis(x2, 1, Dp)
    w1p = _pad_axis(_pad_axis(w1, 0, Dp), 1, Dip)
    b1p = _pad_axis(b1, 0, Dip).reshape(1, Dip)
    w2p = _pad_axis(_pad_axis(w2, 0, Dip), 1, Dp)
    b2p = _pad_axis(b2, 0, Dp).reshape(1, Dp)

    xb = x2.dtype.itemsize
    wb = w1p.dtype.itemsize
    ob = jnp.dtype(out_dtype).itemsize

    resident_bytes = (Dp * Dip + Dip * Dp + Dip + Dp) * wb  # single-buffered weights
    budget = _vmem_budget_bytes()

    # Chunk the hidden dim in-kernel when Di is large (avoid huge f32 intermediate).
    chunked = (Dip >= 2048) and (Dip % _HIDDEN_CHUNK == 0)

    if tile_m is None:
        tile_m = _pick_tile_m(M, Dp, Dip, xb, ob, budget, resident_bytes, chunked)

    # Pad rows so every grid step gets a full tile (zero rows are exact, sliced off).
    Mp = _round_up(M, tile_m)
    x2 = _pad_axis(x2, 0, Mp)
    grid = (Mp // tile_m,)

    in_specs = [
        pl.BlockSpec((tile_m, Dp), lambda i: (i, 0)),   # x row tile (pipelined)
        _resident((Dp, Dip)) if False else _resident_spec((Dp, Dip)),  # W1
        _resident_spec((1, Dip)),                       # b1
        _resident_spec((Dip, Dp)),                      # W2
        _resident_spec((1, Dp)),                        # b2
    ]
    out_specs = pl.BlockSpec((tile_m, Dp), lambda i: (i, 0))

    if chunked:
        kernel = _make_chunked_kernel(Dip // _HIDDEN_CHUNK, _HIDDEN_CHUNK)
        scratch_shapes = [pltpu.VMEM((tile_m, Dp), jnp.float32)]
        interm_bytes = tile_m * Dp * 4
    else:
        kernel = _mlp_kernel
        scratch_shapes = []
        interm_bytes = tile_m * Dip * 4

    vmem_est = (2 * tile_m * Dp * xb            # x tile, double-buffered
                + 2 * tile_m * Dp * ob          # out tile, double-buffered
                + resident_bytes                # single-buffered weights/biases
                + interm_bytes)                 # f32 hidden / accumulator
    vmem_limit = int(min(budget, max(32 * 2**20, int(1.3 * vmem_est))))

    cost = pl.CostEstimate(
        flops=4 * M * Dp * Dip,                 # two matmuls (mul+add)
        transcendentals=M * Dip,                # one logistic per hidden element
        bytes_accessed=(M * Dp * (xb + ob)
                        + (Dp * Dip + Dip * Dp + Dip + Dp) * wb),
    )

    out = pl.pallas_call(
        kernel,
        out_shape=jax.ShapeDtypeStruct((Mp, Dp), out_dtype),
        grid_spec=pltpu.PrefetchScalarGridSpec(
            num_scalar_prefetch=0,
            grid=grid,
            in_specs=in_specs,
            out_specs=out_specs,
            scratch_shapes=scratch_shapes,
        ),
        compiler_params=pltpu.CompilerParams(
            dimension_semantics=("parallel",),
            vmem_limit_bytes=vmem_limit,
        ),
        cost_estimate=cost,
    )(x2, w1p, b1p, w2p, b2p)

    return out[:M, :D].reshape(B, S, D)


# keep old helper name alive (referenced nowhere at runtime; avoids NameError above)
_resident = _resident_spec


def mlp_ref(x, w1, b1, w2, b2):
    h = jnp.einsum("bsd,de->bse", x, w1) + b1
    h = _gelu_tanh(h)
    return jnp.einsum("bse,ed->bsd", h, w2) + b2


if __name__ == "__main__":
    # Small shapes consistent with the module: dim=32, dim_inner=4*dim=128.
    B, S, D = 2, 8, 32
    Di = 4 * D

    key = jax.random.PRNGKey(0)
    kx, k1, k2, k3, k4 = jax.random.split(key, 5)

    x = jax.random.normal(kx, (B, S, D), dtype=jnp.float32)

    # Deterministic nn.Linear-like uniform init; weights stored pre-transposed.
    bound1 = 1.0 / math.sqrt(D)
    bound2 = 1.0 / math.sqrt(Di)
    w1 = jax.random.uniform(k1, (D, Di), jnp.float32, -bound1, bound1)
    b1 = jax.random.uniform(k2, (Di,), jnp.float32, -bound1, bound1)
    w2 = jax.random.uniform(k3, (Di, D), jnp.float32, -bound2, bound2)
    b2 = jax.random.uniform(k4, (D,), jnp.float32, -bound2, bound2)

    # jit the wrapper so pad/reshape/slice fuse around the pallas_call.
    mlp_jit = jax.jit(mlp_pallas)
    out = jax.block_until_ready(mlp_jit(x, w1, b1, w2, b2))
    ref = mlp_ref(x, w1, b1, w2, b2)

    assert out.shape == (B, S, D)
    # bf16 MXU operands with f32 accumulation: loosen tolerance vs f32 reference.
    assert jnp.allclose(out, ref, atol=5e-2, rtol=5e-2), "mismatch vs reference"

    print("KERNEL_OK")
</pallas_src>

<mosaic_0001>
module attributes {stable_mosaic.version = 11 : i64} {
  func.func @_mlp_kernel(%arg0: i32, %arg1: memref<16x128xbf16, #tpu.memory_space<vmem>>, %arg2: memref<128x128xbf16, #tpu.memory_space<vmem>>, %arg3: memref<1x128xbf16, #tpu.memory_space<vmem>>, %arg4: memref<128x128xbf16, #tpu.memory_space<vmem>>, %arg5: memref<1x128xbf16, #tpu.memory_space<vmem>>, %arg6: memref<16x128xf32, #tpu.memory_space<vmem>>) attributes {dimension_semantics = [#tpu.dimension_semantics<parallel>], iteration_bounds = array<i64: 1>, scalar_prefetch = 0 : i64, scratch_operands = 0 : i64, tpu.core_type = #tpu.core_type<tc>, window_params = [{transform_indices = @transform_0, window_bounds = array<i64: 16, 128>}, {pipeline_mode = #tpu.pipeline_mode<synchronous>, transform_indices = @transform_1, window_bounds = array<i64: 128, 128>}, {pipeline_mode = #tpu.pipeline_mode<synchronous>, transform_indices = @transform_2, window_bounds = array<i64: 1, 128>}, {pipeline_mode = #tpu.pipeline_mode<synchronous>, transform_indices = @transform_3, window_bounds = array<i64: 128, 128>}, {pipeline_mode = #tpu.pipeline_mode<synchronous>, transform_indices = @transform_4, window_bounds = array<i64: 1, 128>}, {transform_indices = @transform_5, window_bounds = array<i64: 16, 128>}]} {
    %c0 = arith.constant 0 : index
    %c0_0 = arith.constant 0 : index
    %0 = vector.load %arg1[%c0, %c0_0] : memref<16x128xbf16, #tpu.memory_space<vmem>>, vector<16x128xbf16>
    %c0_1 = arith.constant 0 : index
    %c0_2 = arith.constant 0 : index
    %1 = vector.load %arg2[%c0_1, %c0_2] : memref<128x128xbf16, #tpu.memory_space<vmem>>, vector<128x128xbf16>
    %cst = arith.constant dense<0.000000e+00> : vector<16x128xf32>
    %2 = tpu.matmul %0, %1, %cst {dimension_numbers = #tpu.dot_dimension_numbers<[1], [0], [0], [1], [0, 0, 1, 1], [], []>} : vector<16x128xbf16>, vector<128x128xbf16>, vector<16x128xf32> -> vector<16x128xf32>
    %c0_3 = arith.constant 0 : index
    %c0_4 = arith.constant 0 : index
    %3 = vector.load %arg3[%c0_3, %c0_4] : memref<1x128xbf16, #tpu.memory_space<vmem>>, vector<1x128xbf16>
    %4 = arith.extf %3 : vector<1x128xbf16> to vector<1x128xf32>
    %5 = vector.broadcast %4 : vector<1x128xf32> to vector<16x128xf32>
    %6 = arith.addf %2, %5 : vector<16x128xf32>
    %7 = arith.mulf %6, %6 : vector<16x128xf32>
    %8 = arith.mulf %7, %6 : vector<16x128xf32>
    %cst_5 = arith.constant 4.471500e-02 : f32
    %9 = vector.broadcast %cst_5 : f32 to vector<16x128xf32>
    %10 = arith.mulf %9, %8 : vector<16x128xf32>
    %11 = arith.addf %6, %10 : vector<16x128xf32>
    %cst_6 = arith.constant 1.59576917 : f32
    %12 = vector.broadcast %cst_6 : f32 to vector<16x128xf32>
    %13 = arith.mulf %12, %11 : vector<16x128xf32>
    %14 = arith.negf %13 : vector<16x128xf32>
    %15 = math.exp %14 : vector<16x128xf32>
    %cst_7 = arith.constant 1.000000e+00 : f32
    %16 = vector.broadcast %cst_7 : f32 to vector<16x128xf32>
    %17 = arith.addf %16, %15 : vector<16x128xf32>
    %18 = arith.divf %16, %17 : vector<16x128xf32>
    %19 = arith.mulf %6, %18 : vector<16x128xf32>
    %20 = arith.truncf %19 : vector<16x128xf32> to vector<16x128xbf16>
    %c0_8 = arith.constant 0 : index
    %c0_9 = arith.constant 0 : index
    %21 = vector.load %arg4[%c0_8, %c0_9] : memref<128x128xbf16, #tpu.memory_space<vmem>>, vector<128x128xbf16>
    %cst_10 = arith.constant dense<0.000000e+00> : vector<16x128xf32>
    %22 = tpu.matmul %20, %21, %cst_10 {dimension_numbers = #tpu.dot_dimension_numbers<[1], [0], [0], [1], [0, 0, 1, 1], [], []>} : vector<16x128xbf16>, vector<128x128xbf16>, vector<16x128xf32> -> vector<16x128xf32>
    %c0_11 = arith.constant 0 : index
    %c0_12 = arith.constant 0 : index
    %23 = vector.load %arg5[%c0_11, %c0_12] : memref<1x128xbf16, #tpu.memory_space<vmem>>, vector<1x128xbf16>
    %24 = arith.extf %23 : vector<1x128xbf16> to vector<1x128xf32>
    %25 = vector.broadcast %24 : vector<1x128xf32> to vector<16x128xf32>
    %26 = arith.addf %22, %25 : vector<16x128xf32>
    %c0_13 = arith.constant 0 : index
    %c0_14 = arith.constant 0 : index
    %27 = vector.load %arg6[%c0_13, %c0_14] : memref<16x128xf32, #tpu.memory_space<vmem>>, vector<16x128xf32>
    tpu.vector_store %arg6[%c0_13, %c0_14], %26 {strides = array<i32>} : memref<16x128xf32, #tpu.memory_space<vmem>>, vector<16x128xf32>,
    return
  }
  func.func @transform_0(%arg0: i32) -> (i32, i32) {
    %c0_i32 = arith.constant 0 : i32
    %c0_i32_0 = arith.constant 0 : i32
    return %arg0, %c0_i32 : i32, i32
  }
  func.func @transform_1(%arg0: i32) -> (i32, i32) {
    %c0_i32 = arith.constant 0 : i32
    %c0_i32_0 = arith.constant 0 : i32
    %c0_i32_1 = arith.constant 0 : i32
    return %c0_i32, %c0_i32_0 : i32, i32
  }
  func.func @transform_2(%arg0: i32) -> (i32, i32) {
    %c0_i32 = arith.constant 0 : i32
    %c0_i32_0 = arith.constant 0 : i32
    %c0_i32_1 = arith.constant 0 : i32
    return %c0_i32, %c0_i32_0 : i32, i32
  }
  func.func @transform_3(%arg0: i32) -> (i32, i32) {
    %c0_i32 = arith.constant 0 : i32
    %c0_i32_0 = arith.constant 0 : i32
    %c0_i32_1 = arith.constant 0 : i32
    return %c0_i32, %c0_i32_0 : i32, i32
  }
  func.func @transform_4(%arg0: i32) -> (i32, i32) {
    %c0_i32 = arith.constant 0 : i32
    %c0_i32_0 = arith.constant 0 : i32
    %c0_i32_1 = arith.constant 0 : i32
    return %c0_i32, %c0_i32_0 : i32, i32
  }
  func.func @transform_5(%arg0: i32) -> (i32, i32) {
    %c0_i32 = arith.constant 0 : i32
    %c0_i32_0 = arith.constant 0 : i32
    return %arg0, %c0_i32 : i32, i32
  }
}

</mosaic_0001>

<llo_original>
// kernel: mlp_pallas.1
$region0: #{mlp_pallas.1}
  #allocation0 [shape = 'u32[]', space=smem, size = 0x4, offset = 0x4, fixed_abs, tag = 'smem constant byte address 0x4 - core index']
  #allocation1 [shape = 'u32[144,128]{1,0:T(1,128)}', space=vmem, size = 0x12000, scoped, tag = 'internal scratch']
  %s0 = inlined_call_operand.vmem [shape: bf16[16,128], index: 0, kind: input, shape index: {}]
  %s1 = inlined_call_operand.vmem [shape: bf16[128,128], index: 1, kind: input, shape index: {}]
  %s2 = inlined_call_operand.vmem [shape: bf16[1,128], index: 2, kind: input, shape index: {}]
  %s3 = inlined_call_operand.vmem [shape: bf16[128,128], index: 3, kind: input, shape index: {}]
  %s4 = inlined_call_operand.vmem [shape: bf16[1,128], index: 4, kind: input, shape index: {}]
  %s5 = inlined_call_operand.vmem [shape: f32[16,128], index: 5, kind: output, shape index: {}]
  %s6 = sld [smem:[#allocation0]]
  $region30: #{mlp_pallas.1} parent=0
    _
  %s8 = ssub.s32 1, %s6
  %s9 = scalar_select 0, %s8, %s6
  // Predicated region
  $region2: #{mlp_pallas.1} parent=0 // pred_check
    _
  $region3: #{mlp_pallas.1} parent=0 // pred_check_branch
    %11 = sbr.rel (0) target = $region5
  $region4: #{mlp_pallas.1} parent=0 // pred_region
    _
  $region5: #{mlp_pallas.1} parent=0 // pred_fallthru
    _
  // Predicated region
  $region6: #{mlp_pallas.1} parent=0 // pred_check
    _
  $region7: #{mlp_pallas.1} parent=0 // pred_check_branch
    %13 = sbr.rel (0) target = $region9
  $region8: #{mlp_pallas.1} parent=0 // pred_region
    _
  $region9: #{mlp_pallas.1} parent=0 // pred_fallthru
    _
  // Predicated region
  $region10: #{mlp_pallas.1} parent=0 // pred_check
    _
  $region11: #{mlp_pallas.1} parent=0 // pred_check_branch
    %15 = sbr.rel (0) target = $region13
  $region12: #{mlp_pallas.1} parent=0 // pred_region
    _
  $region13: #{mlp_pallas.1} parent=0 // pred_fallthru
    _
  // Predicated region
  $region14: #{mlp_pallas.1} parent=0 // pred_check
    _
  $region15: #{mlp_pallas.1} parent=0 // pred_check_branch
    %17 = sbr.rel (0) target = $region17
  $region16: #{mlp_pallas.1} parent=0 // pred_region
    _
  $region17: #{mlp_pallas.1} parent=0 // pred_fallthru
    _
  // Predicated region
  $region18: #{mlp_pallas.1} parent=0 // pred_check
    _
  $region19: #{mlp_pallas.1} parent=0 // pred_check_branch
    %19 = sbr.rel (0) target = $region21
  $region20: #{mlp_pallas.1} parent=0 // pred_region
    _
  $region21: #{mlp_pallas.1} parent=0 // pred_fallthru
    _
  %v21 = vld [vmem:[%s0] sm:$0xf]
  %v22 = vld [vmem:[%s0 + $0x4] sm:$0xf]
  %v23 = vld [vmem:[%s1] sm:$0xf]
  %v24 = vld [vmem:[%s1 + $0x4] sm:$0xf]
  %v25 = vld [vmem:[%s1 + $0x8] sm:$0xf]
  %v26 = vld [vmem:[%s1 + $0xc] sm:$0xf]
  %v27 = vld [vmem:[%s1 + $0x10] sm:$0xf]
  %v28 = vld [vmem:[%s1 + $0x14] sm:$0xf]
  %v29 = vld [vmem:[%s1 + $0x18] sm:$0xf]
  %v30 = vld [vmem:[%s1 + $0x1c] sm:$0xf]
  %v31 = vld [vmem:[%s1 + $0x20] sm:$0xf]
  %v32 = vld [vmem:[%s1 + $0x24] sm:$0xf]
  %v33 = vld [vmem:[%s1 + $0x28] sm:$0xf]
  %v34 = vld [vmem:[%s1 + $0x2c] sm:$0xf]
  %v35 = vld [vmem:[%s1 + $0x30] sm:$0xf]
  %v36 = vld [vmem:[%s1 + $0x34] sm:$0xf]
  %v37 = vld [vmem:[%s1 + $0x38] sm:$0xf]
  %v38 = vld [vmem:[%s1 + $0x3c] sm:$0xf]
  %v39 = vld [vmem:[%s2] sm:$0x1]
  %v40 = vunpack.c.l.bf16 %v39
  %v41 = vlaneseq
  %v42 = vshrl.u32 %v41, 7
  %v43 = vsub.s32 0, %v42
  %v44 = vrot.slane %v40, %v43
  %v47 = vunpack.c.l.b16 %v21
  %v48 = vunpack.c.l.b16 %v22
  %v49 = vpack.c.b16 %v48, %v47
  %v67 = vunpack.c.l.b16 %v23
  %v68 = vunpack.c.l.b16 %v24
  %v69 = vunpack.c.l.b16 %v25
  %v70 = vunpack.c.l.b16 %v26
  %v71 = vunpack.c.l.b16 %v27
  %v72 = vunpack.c.l.b16 %v28
  %v73 = vunpack.c.l.b16 %v29
  %v74 = vunpack.c.l.b16 %v30
  %v75 = vunpack.c.l.b16 %v31
  %v76 = vunpack.c.l.b16 %v32
  %v77 = vunpack.c.l.b16 %v33
  %v78 = vunpack.c.l.b16 %v34
  %v79 = vunpack.c.l.b16 %v35
  %v80 = vunpack.c.l.b16 %v36
  %v81 = vunpack.c.l.b16 %v37
  %v82 = vunpack.c.l.b16 %v38
  %v83 = vpack.c.b16 %v68, %v67
  %v84 = vpack.c.b16 %v70, %v69
  %v85 = vpack.c.b16 %v72, %v71
  %v86 = vpack.c.b16 %v74, %v73
  %v87 = vpack.c.b16 %v76, %v75
  %v88 = vpack.c.b16 %v78, %v77
  %v89 = vpack.c.b16 %v80, %v79
  %v90 = vpack.c.b16 %v82, %v81
  %99 = vmatprep.subr.bf16.mxu0 0
  %100 = vmatpush1.bf16.msra.mxu0 %v83
  %101 = vmatprep.subr.bf16.mxu0 0
  %102 = vmatpush1.bf16.msra.mxu0 %v84
  %103 = vmatprep.subr.bf16.mxu0 0
  %104 = vmatpush1.bf16.msra.mxu0 %v85
  %105 = vmatprep.subr.bf16.mxu0 0
  %106 = vmatpush1.bf16.msra.mxu0 %v86
  %107 = vmatprep.subr.bf16.mxu0 0
  %108 = vmatpush1.bf16.msra.mxu0 %v87
  %109 = vmatprep.subr.bf16.mxu0 0
  %110 = vmatpush1.bf16.msra.mxu0 %v88
  %111 = vmatprep.subr.bf16.mxu0 0
  %112 = vmatpush1.bf16.msra.mxu0 %v89
  %113 = vmatprep.subr.bf16.mxu0 0
  %114 = vmatpush1.bf16.msra.mxu0 %v90
  %115 = vmatprep.subr.bf16.mxu0 0
  %116 = vmatpush1.bf16.msra.mxu0 0
  %117 = vmatprep.subr.bf16.mxu0 0
  %118 = vmatpush1.bf16.msra.mxu0 0
  %119 = vmatprep.subr.bf16.mxu0 0
  %120 = vmatpush1.bf16.msra.mxu0 0
  %121 = vmatprep.subr.bf16.mxu0 0
  %122 = vmatpush1.bf16.msra.mxu0 0
  %123 = vmatprep.subr.bf16.mxu0 0
  %124 = vmatpush1.bf16.msra.mxu0 0
  %125 = vmatprep.subr.bf16.mxu0 0
  %126 = vmatpush1.bf16.msra.mxu0 0
  %127 = vmatprep.subr.bf16.mxu0 0
  %128 = vmatpush1.bf16.msra.mxu0 0
  %129 = vmatprep.subr.bf16.mxu0 0
  %130 = vmatpush1.bf16.msra.mxu0 0
  %131 = vmatprep.mubr.bf16.mxu0 0
  %132 = vmatmul.mubr.bf16.gmra.mrb[0].mxu0 %v49
  %v133 = vpop.f32.mrb[0].mxu0
  %v134 = vadd.f32 %v44, %v133
  %v135 = vpop.f32.mrb[0].mxu0
  %v136 = vpop.f32.mrb[0].mxu0
  %v137 = vadd.f32 %v44, %v136
  %v138 = vpop.f32.mrb[0].mxu0
  %139 = vdwg.mxu0
  %v140 = vmul.f32 %v134, %v134
  %v141 = vmul.f32 %v137, %v137
  %v142 = vmul.f32 %v140, %v134
  %v143 = vmul.f32 %v141, %v137
  %v144 = vmul.f32 %v142, 0.044715
  %v145 = vmul.f32 %v143, 0.044715
  %v146 = vadd.f32 %v134, %v144
  %v147 = vadd.f32 %v137, %v145
  %v148 = vmul.f32 %v146, 1.5957692
  %v149 = vmul.f32 %v147, 1.5957692
  %v150 = vxor.u32 %v148, 2147483648
  %v151 = vxor.u32 %v149, 2147483648
  %v152 = vmul.f32 %v150, 1.442695
  %v153 = vpow.pop %v152
  %v154 = vmul.f32 %v151, 1.442695
  %v155 = vpow.pop %v154
  %v156 = vadd.f32 %v153, 1.0
  %v157 = vadd.f32 %v155, 1.0
  %v158 = vrcp.pop %v156
  %v159 = vmul.f32 1.0, %v158
  %v160 = vrcp.pop %v157
  %v161 = vmul.f32 1.0, %v160
  %v162 = vmul.f32 %v134, %v159
  %v163 = vmul.f32 %v137, %v161
  %v164 = vpack.c.bf16 %v163, %v162
  %v165 = vld [vmem:[%s3] sm:$0xf]
  %v166 = vld [vmem:[%s3 + $0x4] sm:$0xf]
  %v167 = vld [vmem:[%s3 + $0x8] sm:$0xf]
  %v168 = vld [vmem:[%s3 + $0xc] sm:$0xf]
  %v169 = vld [vmem:[%s3 + $0x10] sm:$0xf]
  %v170 = vld [vmem:[%s3 + $0x14] sm:$0xf]
  %v171 = vld [vmem:[%s3 + $0x18] sm:$0xf]
  %v172 = vld [vmem:[%s3 + $0x1c] sm:$0xf]
  %v173 = vld [vmem:[%s3 + $0x20] sm:$0xf]
  %v174 = vld [vmem:[%s3 + $0x24] sm:$0xf]
  %v175 = vld [vmem:[%s3 + $0x28] sm:$0xf]
  %v176 = vld [vmem:[%s3 + $0x2c] sm:$0xf]
  %v177 = vld [vmem:[%s3 + $0x30] sm:$0xf]
  %v178 = vld [vmem:[%s3 + $0x34] sm:$0xf]
  %v179 = vld [vmem:[%s3 + $0x38] sm:$0xf]
  %v180 = vld [vmem:[%s3 + $0x3c] sm:$0xf]
  %v181 = vld [vmem:[%s4] sm:$0x1]
  %v182 = vunpack.c.l.bf16 %v181
  %v183 = vlaneseq
  %v184 = vshrl.u32 %v183, 7
  %v185 = vsub.s32 0, %v184
  %v186 = vrot.slane %v182, %v185
  %v203 = vunpack.c.l.b16 %v165
  %v204 = vunpack.c.l.b16 %v166
  %v205 = vunpack.c.l.b16 %v167
  %v206 = vunpack.c.l.b16 %v168
  %v207 = vunpack.c.l.b16 %v169
  %v208 = vunpack.c.l.b16 %v170
  %v209 = vunpack.c.l.b16 %v171
  %v210 = vunpack.c.l.b16 %v172
  %v211 = vunpack.c.l.b16 %v173
  %v212 = vunpack.c.l.b16 %v174
  %v213 = vunpack.c.l.b16 %v175
  %v214 = vunpack.c.l.b16 %v176
  %v215 = vunpack.c.l.b16 %v177
  %v216 = vunpack.c.l.b16 %v178
  %v217 = vunpack.c.l.b16 %v179
  %v218 = vunpack.c.l.b16 %v180
  %v219 = vpack.c.b16 %v204, %v203
  %v220 = vpack.c.b16 %v206, %v205
  %v221 = vpack.c.b16 %v208, %v207
  %v222 = vpack.c.b16 %v210, %v209
  %v223 = vpack.c.b16 %v212, %v211
  %v224 = vpack.c.b16 %v214, %v213
  %v225 = vpack.c.b16 %v216, %v215
  %v226 = vpack.c.b16 %v218, %v217
  %235 = vmatprep.subr.bf16.mxu0 0
  %236 = vmatpush1.bf16.msra.mxu0 %v219
  %237 = vmatprep.subr.bf16.mxu0 0
  %238 = vmatpush1.bf16.msra.mxu0 %v220
  %239 = vmatprep.subr.bf16.mxu0 0
  %240 = vmatpush1.bf16.msra.mxu0 %v221
  %241 = vmatprep.subr.bf16.mxu0 0
  %242 = vmatpush1.bf16.msra.mxu0 %v222
  %243 = vmatprep.subr.bf16.mxu0 0
  %244 = vmatpush1.bf16.msra.mxu0 %v223
  %245 = vmatprep.subr.bf16.mxu0 0
  %246 = vmatpush1.bf16.msra.mxu0 %v224
  %247 = vmatprep.subr.bf16.mxu0 0
  %248 = vmatpush1.bf16.msra.mxu0 %v225
  %249 = vmatprep.subr.bf16.mxu0 0
  %250 = vmatpush1.bf16.msra.mxu0 %v226
  %251 = vmatprep.subr.bf16.mxu0 0
  %252 = vmatpush1.bf16.msra.mxu0 0
  %253 = vmatprep.subr.bf16.mxu0 0
  %254 = vmatpush1.bf16.msra.mxu0 0
  %255 = vmatprep.subr.bf16.mxu0 0
  %256 = vmatpush1.bf16.msra.mxu0 0
  %257 = vmatprep.subr.bf16.mxu0 0
  %258 = vmatpush1.bf16.msra.mxu0 0
  %259 = vmatprep.subr.bf16.mxu0 0
  %260 = vmatpush1.bf16.msra.mxu0 0
  %261 = vmatprep.subr.bf16.mxu0 0
  %262 = vmatpush1.bf16.msra.mxu0 0
  %263 = vmatprep.subr.bf16.mxu0 0
  %264 = vmatpush1.bf16.msra.mxu0 0
  %265 = vmatprep.subr.bf16.mxu0 0
  %266 = vmatpush1.bf16.msra.mxu0 0
  %267 = vmatprep.mubr.bf16.mxu0 0
  %268 = vmatmul.mubr.bf16.gmra.mrb[0].mxu0 %v164
  %v269 = vpop.f32.mrb[0].mxu0
  %v270 = vadd.f32 %v186, %v269
  %v271 = vpop.f32.mrb[0].mxu0
  %v272 = vpop.f32.mrb[0].mxu0
  %v273 = vadd.f32 %v186, %v272
  %v274 = vpop.f32.mrb[0].mxu0
  %275 = vdwg.mxu0
  %276 = vst [vmem:[%s5] sm:$0xff] %v270
  %277 = vst [vmem:[%s5 + $0x8] sm:$0xff] %v273
  // Predicated region
  $region22: #{mlp_pallas.1} parent=0 // pred_check
    _
  $region23: #{mlp_pallas.1} parent=0 // pred_check_branch
    %279 = sbr.rel (0) target = $region25
  $region24: #{mlp_pallas.1} parent=0 // pred_region
    _
  $region25: #{mlp_pallas.1} parent=0 // pred_fallthru
    _
  // Predicated region
  $region26: #{mlp_pallas.1} parent=0 // pred_check
    _
  $region27: #{mlp_pallas.1} parent=0 // pred_check_branch
    %281 = sbr.rel (0) target = $region29
  $region28: #{mlp_pallas.1} parent=0 // pred_region
    _
  $region29: #{mlp_pallas.1} parent=0 // pred_fallthru
    _

</llo_original>
